<compile_context>
chip_gen: v7x
topology: tpu7x:2x2x1
jax: 0.10.0
libtpu: 0.0.40
codegen_flags: <defaults>
</compile_context>

<pallas_src>
import jax
import jax.numpy as jnp
from jax.experimental import pallas as pl
from jax.experimental.pallas import tpu as pltpu

# Contract x dim 1 (IC) against weight dim 1 (IC); weight stays (OC, IC).
_DN = (((1,), (1,)), ((), ()))

# Below this operand+output footprint, use the grid-less single-block path.
_SMALL_BYTES = 4 * 1024 * 1024


def _round_up(v, m):
    return ((v + m - 1) // m) * m


def _vmem():
    return pl.BlockSpec(memory_space=pltpu.MemorySpace.VMEM)


# ---------------- grid-less kernels (whole problem in one VMEM block) --------

def _linear_bias_kernel(x_ref, w_ref, b_ref, o_ref):
    acc = jax.lax.dot_general(x_ref[...], w_ref[...], dimension_numbers=_DN,
                              preferred_element_type=jnp.float32)
    o_ref[...] = (acc + b_ref[...]).astype(o_ref.dtype)


def _linear_nobias_kernel(x_ref, w_ref, o_ref):
    acc = jax.lax.dot_general(x_ref[...], w_ref[...], dimension_numbers=_DN,
                              preferred_element_type=jnp.float32)
    o_ref[...] = acc.astype(o_ref.dtype)


def _linear_small(x, weight, bias):
    B, IC = x.shape
    OC = weight.shape[0]
    OC_pad = _round_up(OC, 128)          # lane-dense output stores
    w = weight
    b = bias
    if OC_pad != OC:
        w = jnp.pad(weight, ((0, OC_pad - OC), (0, 0)))
        if b is not None:
            b = jnp.pad(bias, (0, OC_pad - OC))
    if b is None:
        out = pl.pallas_call(
            _linear_nobias_kernel,
            out_shape=jax.ShapeDtypeStruct((B, OC_pad), x.dtype),
            in_specs=[_vmem(), _vmem()],
            out_specs=_vmem(),
        )(x, w)
    else:
        b2d = b.reshape(1, OC_pad).astype(x.dtype)
        out = pl.pallas_call(
            _linear_bias_kernel,
            out_shape=jax.ShapeDtypeStruct((B, OC_pad), x.dtype),
            in_specs=[_vmem(), _vmem(), _vmem()],
            out_specs=_vmem(),
        )(x, w, b2d)
    return out[:, :OC] if OC_pad != OC else out


# ---------------- tiled (M, N, K) kernels for larger shapes ------------------

def _tiled_bias_kernel(x_ref, w_ref, b_ref, o_ref, acc_ref):
    k = pl.program_id(2)

    @pl.when(k == 0)
    def _init():
        acc_ref[...] = jnp.zeros_like(acc_ref)

    acc_ref[...] += jax.lax.dot_general(
        x_ref[...], w_ref[...], dimension_numbers=_DN,
        preferred_element_type=jnp.float32)

    @pl.when(k == pl.num_programs(2) - 1)
    def _finish():
        o_ref[...] = (acc_ref[...] + b_ref[...]).astype(o_ref.dtype)


def _tiled_nobias_kernel(x_ref, w_ref, o_ref, acc_ref):
    k = pl.program_id(2)

    @pl.when(k == 0)
    def _init():
        acc_ref[...] = jnp.zeros_like(acc_ref)

    acc_ref[...] += jax.lax.dot_general(
        x_ref[...], w_ref[...], dimension_numbers=_DN,
        preferred_element_type=jnp.float32)

    @pl.when(k == pl.num_programs(2) - 1)
    def _finish():
        o_ref[...] = acc_ref[...].astype(o_ref.dtype)


def _linear_tiled(x, weight, bias, tm=256, tn=256, tk=512):
    B, IC = x.shape
    OC = weight.shape[0]
    tm = min(tm, _round_up(B, 8))
    tn = min(tn, _round_up(OC, 128))
    tk = min(tk, _round_up(IC, 128))
    Mp, Np, Kp = _round_up(B, tm), _round_up(OC, tn), _round_up(IC, tk)

    xp = x if (Mp == B and Kp == IC) else jnp.pad(x, ((0, Mp - B), (0, Kp - IC)))
    wp = weight if (Np == OC and Kp == IC) else jnp.pad(
        weight, ((0, Np - OC), (0, Kp - IC)))

    grid = (Mp // tm, Np // tn, Kp // tk)
    x_spec = pl.BlockSpec((tm, tk), lambda i, j, k: (i, k))
    w_spec = pl.BlockSpec((tn, tk), lambda i, j, k: (j, k))   # weight kept (OC, IC)
    o_spec = pl.BlockSpec((tm, tn), lambda i, j, k: (i, j))
    cparams = pltpu.CompilerParams(
        dimension_semantics=("parallel", "parallel", "arbitrary"),
        vmem_limit_bytes=48 * 1024 * 1024)
    scratch = [pltpu.VMEM((tm, tn), jnp.float32)]

    if bias is None:
        out = pl.pallas_call(
            _tiled_nobias_kernel,
            out_shape=jax.ShapeDtypeStruct((Mp, Np), x.dtype),
            grid_spec=pltpu.PrefetchScalarGridSpec(
                num_scalar_prefetch=0, grid=grid,
                in_specs=[x_spec, w_spec], out_specs=o_spec,
                scratch_shapes=scratch),
            compiler_params=cparams,
        )(xp, wp)
    else:
        bp = bias if Np == OC else jnp.pad(bias, (0, Np - OC))
        b2d = bp.reshape(1, Np).astype(x.dtype)
        b_spec = pl.BlockSpec((1, tn), lambda i, j, k: (0, j))
        out = pl.pallas_call(
            _tiled_bias_kernel,
            out_shape=jax.ShapeDtypeStruct((Mp, Np), x.dtype),
            grid_spec=pltpu.PrefetchScalarGridSpec(
                num_scalar_prefetch=0, grid=grid,
                in_specs=[x_spec, w_spec, b_spec], out_specs=o_spec,
                scratch_shapes=scratch),
            compiler_params=cparams,
        )(xp, wp, b2d)

    if Mp != B or Np != OC:
        out = out[:B, :OC]
    return out


def linear_pallas(x, weight, bias=None):
    """y = x @ weight.T (+ bias).  x: (B, IC); weight: (OC, IC); bias: (OC,) | None."""
    B, IC = x.shape
    OC = weight.shape[0]
    itemsize = jnp.dtype(x.dtype).itemsize
    footprint = itemsize * (B * IC + OC * IC + B * _round_up(OC, 128))
    if footprint <= _SMALL_BYTES:
        return _linear_small(x, weight, bias)
    return _linear_tiled(x, weight, bias)


if __name__ == "__main__":
    key = jax.random.PRNGKey(0)
    kx, kw, kb, kx2, kw2, kb2 = jax.random.split(key, 6)

    # Case 1: Linear(ic=32, oc=64, bias=True) — grid-less, lane-padded path.
    B, IC, OC = 8, 32, 64
    x = jax.random.normal(kx, (B, IC), dtype=jnp.float32)
    bound = 1.0 / (IC ** 0.5)
    weight = jax.random.uniform(kw, (OC, IC), jnp.float32, -bound, bound)
    bias = jax.random.uniform(kb, (OC,), jnp.float32, -bound, bound)

    y = jax.block_until_ready(linear_pallas(x, weight, bias))
    y_ref = x @ weight.T + bias
    assert y.shape == (B, OC)
    assert jnp.allclose(y, y_ref, atol=1e-5, rtol=1e-5), "bias-path mismatch"

    # Case 2: same shapes, bias=False (specialized no-bias kernel).
    y2 = jax.block_until_ready(linear_pallas(x, weight, None))
    assert jnp.allclose(y2, x @ weight.T, atol=1e-5, rtol=1e-5), "no-bias mismatch"

    # Case 3: larger shapes exercising the tiled (M, N, K) grid with N/K padding.
    B2, IC2, OC2 = 768, 768, 640
    x2 = jax.random.normal(kx2, (B2, IC2), dtype=jnp.float32)
    bound2 = 1.0 / (IC2 ** 0.5)
    weight2 = jax.random.uniform(kw2, (OC2, IC2), jnp.float32, -bound2, bound2)
    bias2 = jax.random.uniform(kb2, (OC2,), jnp.float32, -bound2, bound2)

    y3 = jax.block_until_ready(linear_pallas(x2, weight2, bias2))
    y3_ref = x2 @ weight2.T + bias2
    assert y3.shape == (B2, OC2)
    # Both kernel and reference use MXU default matmul precision; tolerance
    # covers accumulation-order / precision-mode differences at K=768.
    assert jnp.allclose(y3, y3_ref, atol=2e-2, rtol=2e-2), "tiled-path mismatch"

    print("KERNEL_OK")
</pallas_src>

<mosaic_0001>
module attributes {stable_mosaic.version = 11 : i64} {
  func.func @_linear_bias_kernel(%arg0: memref<8x32xf32, #tpu.memory_space<vmem>>, %arg1: memref<128x32xf32, #tpu.memory_space<vmem>>, %arg2: memref<1x128xf32, #tpu.memory_space<vmem>>, %arg3: memref<8x128xf32, #tpu.memory_space<vmem>>) attributes {dimension_semantics = [], scalar_prefetch = 0 : i64, scratch_operands = 0 : i64, tpu.core_type = #tpu.core_type<tc>} {
    %c0 = arith.constant 0 : index
    %c0_0 = arith.constant 0 : index
    %0 = vector.load %arg0[%c0, %c0_0] : memref<8x32xf32, #tpu.memory_space<vmem>>, vector<8x32xf32>
    %c0_1 = arith.constant 0 : index
    %c0_2 = arith.constant 0 : index
    %1 = vector.load %arg1[%c0_1, %c0_2] : memref<128x32xf32, #tpu.memory_space<vmem>>, vector<128x32xf32>
    %cst = arith.constant dense<0.000000e+00> : vector<8x128xf32>
    %2 = tpu.matmul %0, %1, %cst {dimension_numbers = #tpu.dot_dimension_numbers<[1], [1], [0], [0], [0, 0, 1, 0], [], []>} : vector<8x32xf32>, vector<128x32xf32>, vector<8x128xf32> -> vector<8x128xf32>
    %c0_3 = arith.constant 0 : index
    %c0_4 = arith.constant 0 : index
    %3 = vector.load %arg2[%c0_3, %c0_4] : memref<1x128xf32, #tpu.memory_space<vmem>>, vector<1x128xf32>
    %4 = vector.broadcast %3 : vector<1x128xf32> to vector<8x128xf32>
    %5 = arith.addf %2, %4 : vector<8x128xf32>
    %c0_5 = arith.constant 0 : index
    %c0_6 = arith.constant 0 : index
    %6 = vector.load %arg3[%c0_5, %c0_6] : memref<8x128xf32, #tpu.memory_space<vmem>>, vector<8x128xf32>
    tpu.vector_store %arg3[%c0_5, %c0_6], %5 {strides = array<i32>} : memref<8x128xf32, #tpu.memory_space<vmem>>, vector<8x128xf32>,
    return
  }
}

</mosaic_0001>

<llo_original>
// kernel: tpu_custom_call.1
$region0: #{tpu_custom_call.1}
  #allocation0 [shape = 'u32[]', space=smem, size = 0x4, offset = 0x4, fixed_abs, tag = 'smem constant byte address 0x4 - core index']
  #allocation1 [shape = 'u32[144,128]{1,0:T(1,128)}', space=vmem, size = 0x12000, scoped, tag = 'internal scratch']
  %s0 = inlined_call_operand.vmem [shape: f32[8,32], index: 0, kind: input, shape index: {}]
  %s1 = inlined_call_operand.vmem [shape: f32[128,32], index: 1, kind: input, shape index: {}]
  %s2 = inlined_call_operand.vmem [shape: f32[1,128], index: 2, kind: input, shape index: {}]
  %s3 = inlined_call_operand.hbm [shape: f32[8,128], index: 3, kind: output, shape index: {}]
  %s4 = sld [smem:[#allocation0]]
  $region22: #{tpu_custom_call.1} parent=0
    _
  %s6 = ssub.s32 1, %s4
  %s7 = scalar_select 0, %s6, %s4
  $region1: #{tpu_custom_call.1} parent=0
    #allocation2 [shape = 'u8[4096]{0}', space=vmem, size = 0x1000, scoped, tag = 'output window, operand 0, single buffered']
    #allocation3 [shape = 's32[1]{0}', space=sflag, size = 0x4, scoped, tag = 'scoped memory for tpu_custom_call.1']
    %8 = vsyncpa [#allocation3], 0
    // Predicated region
    $region2: #{tpu_custom_call.1} parent=1 // pred_check
      _
    $region3: #{tpu_custom_call.1} parent=1 // pred_check_branch
      %10 = sbr.rel (0) target = $region5
    $region4: #{tpu_custom_call.1} parent=1 // pred_region
      _
    $region5: #{tpu_custom_call.1} parent=1 // pred_fallthru
      _
    // Predicated region
    $region6: #{tpu_custom_call.1} parent=1 // pred_check
      _
    $region7: #{tpu_custom_call.1} parent=1 // pred_check_branch
      %12 = sbr.rel (0) target = $region9
    $region8: #{tpu_custom_call.1} parent=1 // pred_region
      _
    $region9: #{tpu_custom_call.1} parent=1 // pred_fallthru
      _
    // Predicated region
    $region10: #{tpu_custom_call.1} parent=1 // pred_check
      _
    $region11: #{tpu_custom_call.1} parent=1 // pred_check_branch
      %14 = sbr.rel (0) target = $region13
    $region12: #{tpu_custom_call.1} parent=1 // pred_region
      _
    $region13: #{tpu_custom_call.1} parent=1 // pred_fallthru
      _
    %v15 = vld [vmem:[%s0] sm:$0xff]
    %v16 = vld [vmem:[%s1] sm:$0xff]
    %v17 = vld [vmem:[%s1 + $0x8] sm:$0xff]
    %v18 = vld [vmem:[%s1 + $0x10] sm:$0xff]
    %v19 = vld [vmem:[%s1 + $0x18] sm:$0xff]
    %v20 = vld [vmem:[%s1 + $0x20] sm:$0xff]
    %v21 = vld [vmem:[%s1 + $0x28] sm:$0xff]
    %v22 = vld [vmem:[%s1 + $0x30] sm:$0xff]
    %v23 = vld [vmem:[%s1 + $0x38] sm:$0xff]
    %v24 = vld [vmem:[%s1 + $0x40] sm:$0xff]
    %v25 = vld [vmem:[%s1 + $0x48] sm:$0xff]
    %v26 = vld [vmem:[%s1 + $0x50] sm:$0xff]
    %v27 = vld [vmem:[%s1 + $0x58] sm:$0xff]
    %v28 = vld [vmem:[%s1 + $0x60] sm:$0xff]
    %v29 = vld [vmem:[%s1 + $0x68] sm:$0xff]
    %v30 = vld [vmem:[%s1 + $0x70] sm:$0xff]
    %v31 = vld [vmem:[%s1 + $0x78] sm:$0xff]
    %v32 = vld [vmem:[%s2] sm:$0x1]
    %v34 = vlaneseq
    %v35 = vshrl.u32 %v34, 7
    %v36 = vsub.s32 0, %v35
    %v37 = vrot.slane %v32, %v36
    %vm39 = vcmask 261120
    %v41 = vsel %vm39, %v15, 0
    %v44 = vsel %vm39, %v16, 0
    %v47 = vsel %vm39, %v17, 0
    %v50 = vsel %vm39, %v18, 0
    %v53 = vsel %vm39, %v19, 0
    %v56 = vsel %vm39, %v20, 0
    %v59 = vsel %vm39, %v21, 0
    %v62 = vsel %vm39, %v22, 0
    %v65 = vsel %vm39, %v23, 0
    %v68 = vsel %vm39, %v24, 0
    %v71 = vsel %vm39, %v25, 0
    %v74 = vsel %vm39, %v26, 0
    %v77 = vsel %vm39, %v27, 0
    %v80 = vsel %vm39, %v28, 0
    %v83 = vsel %vm39, %v29, 0
    %v86 = vsel %vm39, %v30, 0
    %v89 = vsel %vm39, %v31, 0
    %91 = vmatprep.subr.mxu0 0.0
    %92 = vmatpush1.xpose.msra.mxu0 %v44
    %93 = vmatprep.subr.mxu0 0.0
    %94 = vmatpush1.xpose.msra.mxu0 %v47
    %95 = vmatprep.subr.mxu0 0.0
    %96 = vmatpush1.xpose.msra.mxu0 %v50
    %97 = vmatprep.subr.mxu0 0.0
    %98 = vmatpush1.xpose.msra.mxu0 %v53
    %99 = vmatprep.subr.mxu0 0.0
    %100 = vmatpush1.xpose.msra.mxu0 %v56
    %101 = vmatprep.subr.mxu0 0.0
    %102 = vmatpush1.xpose.msra.mxu0 %v59
    %103 = vmatprep.subr.mxu0 0.0
    %104 = vmatpush1.xpose.msra.mxu0 %v62
    %105 = vmatprep.subr.mxu0 0.0
    %106 = vmatpush1.xpose.msra.mxu0 %v65
    %107 = vmatprep.subr.mxu0 0.0
    %108 = vmatpush1.xpose.msra.mxu0 %v68
    %109 = vmatprep.subr.mxu0 0.0
    %110 = vmatpush1.xpose.msra.mxu0 %v71
    %111 = vmatprep.subr.mxu0 0.0
    %112 = vmatpush1.xpose.msra.mxu0 %v74
    %113 = vmatprep.subr.mxu0 0.0
    %114 = vmatpush1.xpose.msra.mxu0 %v77
    %115 = vmatprep.subr.mxu0 0.0
    %116 = vmatpush1.xpose.msra.mxu0 %v80
    %117 = vmatprep.subr.mxu0 0.0
    %118 = vmatpush1.xpose.msra.mxu0 %v83
    %119 = vmatprep.subr.mxu0 0.0
    %120 = vmatpush1.xpose.msra.mxu0 %v86
    %121 = vmatprep.subr.mxu0 0.0
    %122 = vmatpush1.xpose.msra.mxu0 %v89
    %123 = vmatprep.subr.mxu0 0.0
    %124 = vmatpush1.xpose.msra.mxu0 0.0
    %125 = vmatprep.subr.mxu0 0.0
    %126 = vmatpush1.xpose.msra.mxu0 0.0
    %127 = vmatprep.subr.mxu0 0.0
    %128 = vmatpush1.xpose.msra.mxu0 0.0
    %129 = vmatprep.subr.mxu0 0.0
    %130 = vmatpush1.xpose.msra.mxu0 0.0
    %131 = vmatprep.subr.mxu0 0.0
    %132 = vmatpush1.xpose.msra.mxu0 0.0
    %133 = vmatprep.subr.mxu0 0.0
    %134 = vmatpush1.xpose.msra.mxu0 0.0
    %135 = vmatprep.subr.mxu0 0.0
    %136 = vmatpush1.xpose.msra.mxu0 0.0
    %137 = vmatprep.subr.mxu0 0.0
    %138 = vmatpush1.xpose.msra.mxu0 0.0
    %139 = vmatprep.subr.mxu0 0.0
    %140 = vmatpush1.xpose.msra.mxu0 0.0
    %141 = vmatprep.subr.mxu0 0.0
    %142 = vmatpush1.xpose.msra.mxu0 0.0
    %143 = vmatprep.subr.mxu0 0.0
    %144 = vmatpush1.xpose.msra.mxu0 0.0
    %145 = vmatprep.subr.mxu0 0.0
    %146 = vmatpush1.xpose.msra.mxu0 0.0
    %147 = vmatprep.subr.mxu0 0.0
    %148 = vmatpush1.xpose.msra.mxu0 0.0
    %149 = vmatprep.subr.mxu0 0.0
    %150 = vmatpush1.xpose.msra.mxu0 0.0
    %151 = vmatprep.subr.mxu0 0.0
    %152 = vmatpush1.xpose.msra.mxu0 0.0
    %153 = vmatprep.subr.mxu0 0.0
    %154 = vmatpush1.xpose.msra.mxu0 0.0
    %155 = vmatprep.mubr.f32.mxu0 0.0
    %156 = vmatmul.mubr.f32.gmra.mrb[0].mxu0 %v41
    %v157 = vpop.f32.mrb[0].mxu0
    %v158 = vadd.f32 %v37, %v157
    %v159 = vpop.f32.mrb[0].mxu0
    %160 = vdwg.mxu0
    %161 = vst [vmem:[#allocation2] sm:$0xff] %v158
    // Predicated region
    $region14: #{tpu_custom_call.1} parent=1 // pred_check
      _
    $region15: #{tpu_custom_call.1} parent=1 // pred_check_branch
      %163 = sbr.rel (0) target = $region17
    $region16: #{tpu_custom_call.1} parent=1 // pred_region
      %s165 = ssub.s32 128, 128
      %166 = vsyncadd [#allocation3], %s165
      %s168 = sshll.u32 [#allocation2], 4
      %s169 = int_to_ptr.vmem [resolvable:$true] %s168
      %171 = dma.vmem_to_hbm [thread:$0]  %s169, 128, %s3, [#allocation3]
    $region17: #{tpu_custom_call.1} parent=1 // pred_fallthru
      _
    // Predicated region
    $region18: #{tpu_custom_call.1} parent=1 // pred_check
      _
    $region19: #{tpu_custom_call.1} parent=1 // pred_check_branch
      %173 = sbr.rel (0) target = $region21
    $region20: #{tpu_custom_call.1} parent=1 // pred_region
      %174 = dma.done [#allocation3], 128
    $region21: #{tpu_custom_call.1} parent=1 // pred_fallthru
      _
    %175 = vsyncpa [#allocation3], 1

</llo_original>
